<compile_context>
chip_gen: v6e
topology: v6e:2x2x1
jax: 0.10.0
libtpu: 0.0.40
codegen_flags: <defaults>
</compile_context>

<pallas_src>
import jax
import jax.numpy as jnp
from jax.experimental import pallas as pl
from jax.experimental.pallas import tpu as pltpu


def _round_up(x, m):
    return ((x + m - 1) // m) * m


def _pick_block_words(n_words):
    """Words per grid step: multiple of 8 (sublane-aligned output rows),
    capped at 64 (bounds per-step VMEM; v7x-safe), shrunk so the grid keeps
    >= 2 steps when there is enough work (v7x has 2 TensorCores)."""
    w = 64
    while w > 8 and (n_words + w - 1) // w < 2:
        w //= 2
    return w


def word_cnn_kernel(gid_ref, f_hi_ref, f_lo_ref, b_ref, out_ref):
    # gid_ref : (R, 3) int32   -- fused-table row id per (conv row, tap).
    #                             Padding taps point at an all-zero F row,
    #                             alignment rows (t >= L+2) at a -1e30 row,
    #                             so no mask / select is needed in-kernel.
    # f_hi/f_lo: (K_pad, Cp) bf16 -- hi/lo split of the fused embed*conv table
    #                                (f32 accuracy at native bf16 MXU rate).
    # b_ref   : (1, Cp) f32    -- conv bias (per-channel, added after the max).
    # out_ref : (W, Cp) f32    -- pooled output, 8-row / 128-lane aligned block.
    R = gid_ref.shape[0]
    K = f_hi_ref.shape[0]
    W, Cp = out_ref.shape
    T_pad = R // W

    g = gid_ref[...]
    g0 = g[:, 0:1]
    g1 = g[:, 1:2]
    g2 = g[:, 2:3]

    # Combined one-hot over fused-table rows; the three taps live in disjoint
    # id ranges so OR-ing three compares builds the (R, K_pad) one-hot at once.
    # 0/1 is exact in bf16, so the cast costs no accuracy.
    j = jax.lax.broadcasted_iota(jnp.int32, (R, K), 1)
    oh = ((g0 == j) | (g1 == j) | (g2 == j)).astype(jnp.bfloat16)

    # Fused "embedding gather + conv" as bf16 MXU GEMMs with f32 accumulation;
    # hi + lo reconstructs the f32 table up to the lo-term rounding (~2^-17).
    conv = jnp.dot(oh, f_hi_ref[...], preferred_element_type=jnp.float32)
    conv = conv + jnp.dot(oh, f_lo_ref[...], preferred_element_type=jnp.float32)

    # Max-pool over the (padded) conv height of each word; alignment rows carry
    # -1e30 so they never win. Bias is per-channel -> exact to add after max.
    pooled = jnp.max(conv.reshape(W, T_pad, Cp), axis=1) + b_ref[...]
    out_ref[...] = pooled.astype(out_ref.dtype)


def word_cnn_forward(char_ids, embed_table, conv_w, conv_b):
    """char_ids: (B, S, L) int; conv_w: PyTorch layout (C, 1, 3, E); conv_b: (C,)."""
    B, S, L = char_ids.shape
    V, E = embed_table.shape
    C = conv_w.shape[0]
    T = L + 2                                  # conv output height (pad=2, kh=3)
    T_pad = _round_up(T, 8)                    # sublane-aligned rows per word
    Cp = _round_up(C, 128)                     # lane-dense output channels
    K_pad = _round_up(3 * V + 2, 256)          # whole MXU K tiles + sentinel rows
    NEG_ROW = 3 * V                            # all -1e30: alignment (t >= T) rows
    ZERO_ROW = 3 * V + 1                       # all zeros : zero-padding taps

    N = B * S
    W = _pick_block_words(N)                   # words per grid step
    N_pad = _round_up(N, W)
    grid = N_pad // W
    R_step = W * T_pad                         # GEMM rows per grid step

    # ---- one-time parameter fusion: F[kh*V + v, c] = embed[v] . w[c, 0, kh] ----
    w_kec = jnp.transpose(conv_w[:, 0, :, :].astype(jnp.float32), (1, 2, 0))   # (3,E,C)
    F = jnp.einsum('ve,kec->kvc', embed_table.astype(jnp.float32), w_kec)      # (3,V,C)
    F = F.reshape(3 * V, C)
    F_full = jnp.zeros((K_pad, Cp), jnp.float32)
    F_full = F_full.at[:3 * V, :C].set(F)
    F_full = F_full.at[NEG_ROW, :].set(-1e30)
    f_hi = F_full.astype(jnp.bfloat16)
    f_lo = (F_full - f_hi.astype(jnp.float32)).astype(jnp.bfloat16)
    bias_p = jnp.pad(conv_b.astype(jnp.float32), (0, Cp - C)).reshape(1, Cp)

    # ---- index prep: gid[w*T_pad + t, kh] = ids[w, t+kh-2] + kh*V (valid taps),
    #      ZERO_ROW for out-of-word padding taps, NEG_ROW for alignment rows.
    # TODO(synk): out-of-range char ids are not checked (as in PyTorch they would
    # index the embedding table); in-range ids are assumed.
    ids_flat = char_ids.reshape(N, L).astype(jnp.int32)
    ids_flat = jnp.pad(ids_flat, ((0, N_pad - N), (0, 0)))            # (N_pad, L)
    t = jnp.arange(T_pad)
    kh = jnp.arange(3)
    p = t[:, None] + kh[None, :] - 2                                  # (T_pad, 3)
    tap_valid = (p >= 0) & (p < L)
    row_real = (t < T)[:, None]
    p_c = jnp.clip(p, 0, L - 1)
    g = ids_flat[:, p_c] + (kh * V)[None, None, :]                    # (N_pad,T_pad,3)
    g = jnp.where(tap_valid[None], g, ZERO_ROW)
    g = jnp.where(row_real[None], g, NEG_ROW)
    gids = g.reshape(N_pad * T_pad, 3)            # one contiguous DMA per grid step

    out_padded = pl.pallas_call(
        word_cnn_kernel,
        out_shape=jax.ShapeDtypeStruct((N_pad, Cp), jnp.float32),
        grid_spec=pltpu.PrefetchScalarGridSpec(
            num_scalar_prefetch=0,
            grid=(grid,),
            in_specs=[
                pl.BlockSpec((R_step, 3), lambda i: (i, 0)),
                pl.BlockSpec((K_pad, Cp), lambda i: (0, 0)),
                pl.BlockSpec((K_pad, Cp), lambda i: (0, 0)),
                pl.BlockSpec((1, Cp), lambda i: (0, 0)),
            ],
            out_specs=pl.BlockSpec((W, Cp), lambda i: (i, 0)),
        ),
        compiler_params=pltpu.CompilerParams(
            dimension_semantics=("parallel",)),
    )(gids, f_hi, f_lo, bias_p)

    return out_padded[:N, :C].reshape(B, S, C)


def reference(char_ids, embed_table, conv_w, conv_b):
    """Pure-JAX reference matching the PyTorch forward exactly."""
    batch, S, L = char_ids.shape
    C = conv_w.shape[0]
    flat = char_ids.reshape(batch * S, L)
    emb = embed_table[flat]                        # (N, L, E)
    x = emb[:, None, :, :]                         # NCHW (N, 1, L, E)
    conv = jax.lax.conv_general_dilated(
        x, conv_w, window_strides=(1, 1),
        padding=((2, 2), (0, 0)),
        dimension_numbers=('NCHW', 'OIHW', 'NCHW'))
    conv = conv + conv_b[None, :, None, None]      # (N, C, L+2, 1)
    pooled = jnp.max(conv, axis=(2, 3))            # (N, C)
    return pooled.reshape(batch, S, C)


if __name__ == "__main__":
    # Module hyperparameters (small but consistent with __init__).
    char_vocab_size = 64     # V
    char_embedding_dim = 32  # E
    char_out_dim = 16        # C
    batch, max_sent_len, max_word_len = 2, 4, 8  # B, S, L

    key = jax.random.PRNGKey(0)
    k_idx, k_emb, k_w, k_b = jax.random.split(key, 4)

    char_ids = jax.random.randint(
        k_idx, (batch, max_sent_len, max_word_len), 0, char_vocab_size,
        dtype=jnp.int32)
    # nn.Embedding default init: N(0, 1).
    embed_table = jax.random.normal(
        k_emb, (char_vocab_size, char_embedding_dim), dtype=jnp.float32)
    # nn.Conv2d default init: U(-1/sqrt(fan_in), 1/sqrt(fan_in)), fan_in = 1*3*E.
    fan_in = 1 * 3 * char_embedding_dim
    bound = 1.0 / (fan_in ** 0.5)
    conv_w = jax.random.uniform(
        k_w, (char_out_dim, 1, 3, char_embedding_dim), jnp.float32, -bound, bound)
    conv_b = jax.random.uniform(k_b, (char_out_dim,), jnp.float32, -bound, bound)

    forward = jax.jit(word_cnn_forward)
    out = forward(char_ids, embed_table, conv_w, conv_b)
    jax.block_until_ready(out)

    ref = reference(char_ids, embed_table, conv_w, conv_b)
    assert out.shape == (batch, max_sent_len, char_out_dim)
    max_err = float(jnp.max(jnp.abs(out - ref)))
    assert jnp.allclose(out, ref, atol=1e-4, rtol=1e-4), max_err

    # TODO(synk): PyTorch forward() only prints shapes and returns None; we
    # return the final pooled tensor (batch, max_sent_len, char_out_dim) instead.
    print("KERNEL_OK")
</pallas_src>

<mosaic_0001>
module attributes {stable_mosaic.version = 11 : i64} {
  func.func @word_cnn_kernel(%arg0: i32, %arg1: memref<128x3xi32, #tpu.memory_space<vmem>>, %arg2: memref<256x128xbf16, #tpu.memory_space<vmem>>, %arg3: memref<256x128xbf16, #tpu.memory_space<vmem>>, %arg4: memref<1x128xf32, #tpu.memory_space<vmem>>, %arg5: memref<8x128xf32, #tpu.memory_space<vmem>>) attributes {dimension_semantics = [#tpu.dimension_semantics<parallel>], iteration_bounds = array<i64: 1>, scalar_prefetch = 0 : i64, scratch_operands = 0 : i64, tpu.core_type = #tpu.core_type<tc>, window_params = [{transform_indices = @transform_0, window_bounds = array<i64: 128, 3>}, {pipeline_mode = #tpu.pipeline_mode<synchronous>, transform_indices = @transform_1, window_bounds = array<i64: 256, 128>}, {pipeline_mode = #tpu.pipeline_mode<synchronous>, transform_indices = @transform_2, window_bounds = array<i64: 256, 128>}, {pipeline_mode = #tpu.pipeline_mode<synchronous>, transform_indices = @transform_3, window_bounds = array<i64: 1, 128>}, {transform_indices = @transform_4, window_bounds = array<i64: 8, 128>}]} {
    %c0 = arith.constant 0 : index
    %c0_0 = arith.constant 0 : index
    %0 = vector.load %arg1[%c0, %c0_0] : memref<128x3xi32, #tpu.memory_space<vmem>>, vector<128x3xi32>
    %1 = vector.extract_strided_slice %0 {offsets = [0, 0], sizes = [128, 1], strides = [1, 1]} : vector<128x3xi32> to vector<128x1xi32>
    %2 = vector.extract_strided_slice %0 {offsets = [0, 1], sizes = [128, 1], strides = [1, 1]} : vector<128x3xi32> to vector<128x1xi32>
    %3 = vector.extract_strided_slice %0 {offsets = [0, 2], sizes = [128, 1], strides = [1, 1]} : vector<128x3xi32> to vector<128x1xi32>
    %4 = tpu.iota {dimensions = array<i32: 1>} : vector<128x256xi32>
    %5 = vector.broadcast %1 : vector<128x1xi32> to vector<128x256xi32>
    %6 = arith.cmpi eq, %5, %4 : vector<128x256xi32>
    %7 = vector.broadcast %2 : vector<128x1xi32> to vector<128x256xi32>
    %8 = arith.cmpi eq, %7, %4 : vector<128x256xi32>
    %9 = arith.ori %6, %8 : vector<128x256xi1>
    %10 = vector.broadcast %3 : vector<128x1xi32> to vector<128x256xi32>
    %11 = arith.cmpi eq, %10, %4 : vector<128x256xi32>
    %12 = arith.ori %9, %11 : vector<128x256xi1>
    %13 = arith.extui %12 : vector<128x256xi1> to vector<128x256xi32>
    %14 = arith.sitofp %13 : vector<128x256xi32> to vector<128x256xf32>
    %15 = arith.truncf %14 : vector<128x256xf32> to vector<128x256xbf16>
    %c0_1 = arith.constant 0 : index
    %c0_2 = arith.constant 0 : index
    %16 = vector.load %arg2[%c0_1, %c0_2] : memref<256x128xbf16, #tpu.memory_space<vmem>>, vector<256x128xbf16>
    %cst = arith.constant dense<0.000000e+00> : vector<128x128xf32>
    %17 = tpu.matmul %15, %16, %cst {dimension_numbers = #tpu.dot_dimension_numbers<[1], [0], [0], [1], [0, 0, 1, 1], [], []>} : vector<128x256xbf16>, vector<256x128xbf16>, vector<128x128xf32> -> vector<128x128xf32>
    %c0_3 = arith.constant 0 : index
    %c0_4 = arith.constant 0 : index
    %18 = vector.load %arg3[%c0_3, %c0_4] : memref<256x128xbf16, #tpu.memory_space<vmem>>, vector<256x128xbf16>
    %cst_5 = arith.constant dense<0.000000e+00> : vector<128x128xf32>
    %19 = tpu.matmul %15, %18, %cst_5 {dimension_numbers = #tpu.dot_dimension_numbers<[1], [0], [0], [1], [0, 0, 1, 1], [], []>} : vector<128x256xbf16>, vector<256x128xbf16>, vector<128x128xf32> -> vector<128x128xf32>
    %20 = arith.addf %17, %19 : vector<128x128xf32>
    %21 = vector.shape_cast %20 : vector<128x128xf32> to vector<8x16x128xf32>
    %cst_6 = arith.constant dense<0xFF800000> : vector<8x128xf32>
    %22 = vector.multi_reduction <maximumf>, %21, %cst_6 [1] : vector<8x16x128xf32> to vector<8x128xf32>
    %c0_7 = arith.constant 0 : index
    %c0_8 = arith.constant 0 : index
    %23 = vector.load %arg4[%c0_7, %c0_8] : memref<1x128xf32, #tpu.memory_space<vmem>>, vector<1x128xf32>
    %24 = vector.broadcast %23 : vector<1x128xf32> to vector<8x128xf32>
    %25 = arith.addf %22, %24 : vector<8x128xf32>
    %c0_9 = arith.constant 0 : index
    %c0_10 = arith.constant 0 : index
    %26 = vector.load %arg5[%c0_9, %c0_10] : memref<8x128xf32, #tpu.memory_space<vmem>>, vector<8x128xf32>
    tpu.vector_store %arg5[%c0_9, %c0_10], %25 {strides = array<i32>} : memref<8x128xf32, #tpu.memory_space<vmem>>, vector<8x128xf32>,
    return
  }
  func.func @transform_0(%arg0: i32) -> (i32, i32) {
    %c0_i32 = arith.constant 0 : i32
    %c0_i32_0 = arith.constant 0 : i32
    return %arg0, %c0_i32 : i32, i32
  }
  func.func @transform_1(%arg0: i32) -> (i32, i32) {
    %c0_i32 = arith.constant 0 : i32
    %c0_i32_0 = arith.constant 0 : i32
    %c0_i32_1 = arith.constant 0 : i32
    return %c0_i32, %c0_i32_0 : i32, i32
  }
  func.func @transform_2(%arg0: i32) -> (i32, i32) {
    %c0_i32 = arith.constant 0 : i32
    %c0_i32_0 = arith.constant 0 : i32
    %c0_i32_1 = arith.constant 0 : i32
    return %c0_i32, %c0_i32_0 : i32, i32
  }
  func.func @transform_3(%arg0: i32) -> (i32, i32) {
    %c0_i32 = arith.constant 0 : i32
    %c0_i32_0 = arith.constant 0 : i32
    %c0_i32_1 = arith.constant 0 : i32
    return %c0_i32, %c0_i32_0 : i32, i32
  }
  func.func @transform_4(%arg0: i32) -> (i32, i32) {
    %c0_i32 = arith.constant 0 : i32
    %c0_i32_0 = arith.constant 0 : i32
    return %arg0, %c0_i32 : i32, i32
  }
}

</mosaic_0001>

<llo_original>
// kernel: word_cnn_forward.1
$region0: #{word_cnn_forward.1}
  #allocation0 [shape = 'u32[]', space=smem, size = 0x4, offset = 0x4, fixed_abs, tag = 'smem constant byte address 0x4 - core index']
  #allocation1 [shape = 'u32[144,128]{1,0:T(1,128)}', space=vmem, size = 0x12000, scoped, tag = 'internal scratch']
  %s0 = inlined_call_operand.vmem [shape: s32[128,3], index: 0, kind: input, shape index: {}]
  %s1 = inlined_call_operand.vmem [shape: bf16[256,128], index: 1, kind: input, shape index: {}]
  %s2 = inlined_call_operand.vmem [shape: bf16[256,128], index: 2, kind: input, shape index: {}]
  %s3 = inlined_call_operand.vmem [shape: f32[1,128], index: 3, kind: input, shape index: {}]
  %s4 = inlined_call_operand.hbm [shape: f32[8,128], index: 4, kind: output, shape index: {}]
  %s5 = sld [smem:[#allocation0]]
  $region26: #{word_cnn_forward.1} parent=0
    _
  %s7 = ssub.s32 1, %s5
  %s8 = scalar_select 0, %s7, %s5
  $region1: #{word_cnn_forward.1} parent=0
    #allocation2 [shape = 'u8[4096]{0}', space=vmem, size = 0x1000, scoped, tag = 'output window, operand 0, single buffered']
    #allocation3 [shape = 's32[1]{0}', space=sflag, size = 0x4, scoped, tag = 'scoped memory for word_cnn_forward.1']
    %9 = vsyncpa [#allocation3], 0
    // Predicated region
    $region2: #{word_cnn_forward.1} parent=1 // pred_check
      _
    $region3: #{word_cnn_forward.1} parent=1 // pred_check_branch
      %11 = sbr.rel (0) target = $region5
    $region4: #{word_cnn_forward.1} parent=1 // pred_region
      _
    $region5: #{word_cnn_forward.1} parent=1 // pred_fallthru
      _
    // Predicated region
    $region6: #{word_cnn_forward.1} parent=1 // pred_check
      _
    $region7: #{word_cnn_forward.1} parent=1 // pred_check_branch
      %13 = sbr.rel (0) target = $region9
    $region8: #{word_cnn_forward.1} parent=1 // pred_region
      _
    $region9: #{word_cnn_forward.1} parent=1 // pred_fallthru
      _
    // Predicated region
    $region10: #{word_cnn_forward.1} parent=1 // pred_check
      _
    $region11: #{word_cnn_forward.1} parent=1 // pred_check_branch
      %15 = sbr.rel (0) target = $region13
    $region12: #{word_cnn_forward.1} parent=1 // pred_region
      _
    $region13: #{word_cnn_forward.1} parent=1 // pred_fallthru
      _
    // Predicated region
    $region14: #{word_cnn_forward.1} parent=1 // pred_check
      _
    $region15: #{word_cnn_forward.1} parent=1 // pred_check_branch
      %17 = sbr.rel (0) target = $region17
    $region16: #{word_cnn_forward.1} parent=1 // pred_region
      _
    $region17: #{word_cnn_forward.1} parent=1 // pred_fallthru
      _
    %v19 = vld [vmem:[%s0] sm:$0xff]
    %v20 = vld [vmem:[%s0 + $0x8] sm:$0xff]
    %v21 = vld [vmem:[%s0 + $0x10] sm:$0xff]
    %v22 = vld [vmem:[%s0 + $0x18] sm:$0xff]
    %v23 = vld [vmem:[%s0 + $0x20] sm:$0xff]
    %v24 = vld [vmem:[%s0 + $0x28] sm:$0xff]
    %v25 = vld [vmem:[%s0 + $0x30] sm:$0xff]
    %v26 = vld [vmem:[%s0 + $0x38] sm:$0xff]
    %v27 = vld [vmem:[%s0 + $0x40] sm:$0xff]
    %v28 = vld [vmem:[%s0 + $0x48] sm:$0xff]
    %v29 = vld [vmem:[%s0 + $0x50] sm:$0xff]
    %v30 = vld [vmem:[%s0 + $0x58] sm:$0xff]
    %v31 = vld [vmem:[%s0 + $0x60] sm:$0xff]
    %v32 = vld [vmem:[%s0 + $0x68] sm:$0xff]
    %v33 = vld [vmem:[%s0 + $0x70] sm:$0xff]
    %v34 = vld [vmem:[%s0 + $0x78] sm:$0xff]
    %v35 = vlaneseq
    %v36 = vand.u32 %v35, 127
    %v37 = vadd.s32 %v36, 128
    %38 = vset.pattern.permute.xlu0 0
    %39 = vperm.xlu0 %38, %v19
    %v40 = vpop.permute.xlu0 %39
    %41 = vset.pattern.permute.xlu0 0
    %42 = vperm.xlu0 %41, %v20
    %v43 = vpop.permute.xlu0 %42
    %44 = vset.pattern.permute.xlu0 0
    %45 = vperm.xlu0 %44, %v21
    %v46 = vpop.permute.xlu0 %45
    %47 = vset.pattern.permute.xlu0 0
    %48 = vperm.xlu0 %47, %v22
    %v49 = vpop.permute.xlu0 %48
    %50 = vset.pattern.permute.xlu0 0
    %51 = vperm.xlu0 %50, %v23
    %v52 = vpop.permute.xlu0 %51
    %53 = vset.pattern.permute.xlu0 0
    %54 = vperm.xlu0 %53, %v24
    %v55 = vpop.permute.xlu0 %54
    %56 = vset.pattern.permute.xlu0 0
    %57 = vperm.xlu0 %56, %v25
    %v58 = vpop.permute.xlu0 %57
    %59 = vset.pattern.permute.xlu0 0
    %60 = vperm.xlu0 %59, %v26
    %v61 = vpop.permute.xlu0 %60
    %62 = vset.pattern.permute.xlu0 0
    %63 = vperm.xlu0 %62, %v27
    %v64 = vpop.permute.xlu0 %63
    %65 = vset.pattern.permute.xlu0 0
    %66 = vperm.xlu0 %65, %v28
    %v67 = vpop.permute.xlu0 %66
    %68 = vset.pattern.permute.xlu0 0
    %69 = vperm.xlu0 %68, %v29
    %v70 = vpop.permute.xlu0 %69
    %71 = vset.pattern.permute.xlu0 0
    %72 = vperm.xlu0 %71, %v30
    %v73 = vpop.permute.xlu0 %72
    %74 = vset.pattern.permute.xlu0 0
    %75 = vperm.xlu0 %74, %v31
    %v76 = vpop.permute.xlu0 %75
    %77 = vset.pattern.permute.xlu0 0
    %78 = vperm.xlu0 %77, %v32
    %v79 = vpop.permute.xlu0 %78
    %80 = vset.pattern.permute.xlu0 0
    %81 = vperm.xlu0 %80, %v33
    %v82 = vpop.permute.xlu0 %81
    %83 = vset.pattern.permute.xlu0 0
    %84 = vperm.xlu0 %83, %v34
    %v85 = vpop.permute.xlu0 %84
    %vm86 = vcmp.eq.s32.totalorder %v40, %v36
    %vm87 = vcmp.eq.s32.totalorder %v40, %v37
    %vm88 = vcmp.eq.s32.totalorder %v43, %v36
    %vm89 = vcmp.eq.s32.totalorder %v43, %v37
    %vm90 = vcmp.eq.s32.totalorder %v46, %v36
    %vm91 = vcmp.eq.s32.totalorder %v46, %v37
    %vm92 = vcmp.eq.s32.totalorder %v49, %v36
    %vm93 = vcmp.eq.s32.totalorder %v49, %v37
    %vm94 = vcmp.eq.s32.totalorder %v52, %v36
    %vm95 = vcmp.eq.s32.totalorder %v52, %v37
    %vm96 = vcmp.eq.s32.totalorder %v55, %v36
    %vm97 = vcmp.eq.s32.totalorder %v55, %v37
    %vm98 = vcmp.eq.s32.totalorder %v58, %v36
    %vm99 = vcmp.eq.s32.totalorder %v58, %v37
    %vm100 = vcmp.eq.s32.totalorder %v61, %v36
    %vm101 = vcmp.eq.s32.totalorder %v61, %v37
    %vm102 = vcmp.eq.s32.totalorder %v64, %v36
    %vm103 = vcmp.eq.s32.totalorder %v64, %v37
    %vm104 = vcmp.eq.s32.totalorder %v67, %v36
    %vm105 = vcmp.eq.s32.totalorder %v67, %v37
    %vm106 = vcmp.eq.s32.totalorder %v70, %v36
    %vm107 = vcmp.eq.s32.totalorder %v70, %v37
    %vm108 = vcmp.eq.s32.totalorder %v73, %v36
    %vm109 = vcmp.eq.s32.totalorder %v73, %v37
    %vm110 = vcmp.eq.s32.totalorder %v76, %v36
    %vm111 = vcmp.eq.s32.totalorder %v76, %v37
    %vm112 = vcmp.eq.s32.totalorder %v79, %v36
    %vm113 = vcmp.eq.s32.totalorder %v79, %v37
    %vm114 = vcmp.eq.s32.totalorder %v82, %v36
    %vm115 = vcmp.eq.s32.totalorder %v82, %v37
    %vm116 = vcmp.eq.s32.totalorder %v85, %v36
    %vm117 = vcmp.eq.s32.totalorder %v85, %v37
    %118 = vset.pattern.permute.xlu0 1
    %119 = vperm.xlu0 %118, %v19
    %v120 = vpop.permute.xlu0 %119
    %121 = vset.pattern.permute.xlu0 1
    %122 = vperm.xlu0 %121, %v20
    %v123 = vpop.permute.xlu0 %122
    %124 = vset.pattern.permute.xlu0 1
    %125 = vperm.xlu0 %124, %v21
    %v126 = vpop.permute.xlu0 %125
    %127 = vset.pattern.permute.xlu0 1
    %128 = vperm.xlu0 %127, %v22
    %v129 = vpop.permute.xlu0 %128
    %130 = vset.pattern.permute.xlu0 1
    %131 = vperm.xlu0 %130, %v23
    %v132 = vpop.permute.xlu0 %131
    %133 = vset.pattern.permute.xlu0 1
    %134 = vperm.xlu0 %133, %v24
    %v135 = vpop.permute.xlu0 %134
    %136 = vset.pattern.permute.xlu0 1
    %137 = vperm.xlu0 %136, %v25
    %v138 = vpop.permute.xlu0 %137
    %139 = vset.pattern.permute.xlu0 1
    %140 = vperm.xlu0 %139, %v26
    %v141 = vpop.permute.xlu0 %140
    %142 = vset.pattern.permute.xlu0 1
    %143 = vperm.xlu0 %142, %v27
    %v144 = vpop.permute.xlu0 %143
    %145 = vset.pattern.permute.xlu0 1
    %146 = vperm.xlu0 %145, %v28
    %v147 = vpop.permute.xlu0 %146
    %148 = vset.pattern.permute.xlu0 1
    %149 = vperm.xlu0 %148, %v29
    %v150 = vpop.permute.xlu0 %149
    %151 = vset.pattern.permute.xlu0 1
    %152 = vperm.xlu0 %151, %v30
    %v153 = vpop.permute.xlu0 %152
    %154 = vset.pattern.permute.xlu0 1
    %155 = vperm.xlu0 %154, %v31
    %v156 = vpop.permute.xlu0 %155
    %157 = vset.pattern.permute.xlu0 1
    %158 = vperm.xlu0 %157, %v32
    %v159 = vpop.permute.xlu0 %158
    %160 = vset.pattern.permute.xlu0 1
    %161 = vperm.xlu0 %160, %v33
    %v162 = vpop.permute.xlu0 %161
    %163 = vset.pattern.permute.xlu0 1
    %164 = vperm.xlu0 %163, %v34
    %v165 = vpop.permute.xlu0 %164
    %vm166 = vcmp.eq.s32.totalorder %v120, %v36
    %vm167 = vcmp.eq.s32.totalorder %v120, %v37
    %vm168 = vcmp.eq.s32.totalorder %v123, %v36
    %vm169 = vcmp.eq.s32.totalorder %v123, %v37
    %vm170 = vcmp.eq.s32.totalorder %v126, %v36
    %vm171 = vcmp.eq.s32.totalorder %v126, %v37
    %vm172 = vcmp.eq.s32.totalorder %v129, %v36
    %vm173 = vcmp.eq.s32.totalorder %v129, %v37
    %vm174 = vcmp.eq.s32.totalorder %v132, %v36
    %vm175 = vcmp.eq.s32.totalorder %v132, %v37
    %vm176 = vcmp.eq.s32.totalorder %v135, %v36
    %vm177 = vcmp.eq.s32.totalorder %v135, %v37
    %vm178 = vcmp.eq.s32.totalorder %v138, %v36
    %vm179 = vcmp.eq.s32.totalorder %v138, %v37
    %vm180 = vcmp.eq.s32.totalorder %v141, %v36
    %vm181 = vcmp.eq.s32.totalorder %v141, %v37
    %vm182 = vcmp.eq.s32.totalorder %v144, %v36
    %vm183 = vcmp.eq.s32.totalorder %v144, %v37
    %vm184 = vcmp.eq.s32.totalorder %v147, %v36
    %vm185 = vcmp.eq.s32.totalorder %v147, %v37
    %vm186 = vcmp.eq.s32.totalorder %v150, %v36
    %vm187 = vcmp.eq.s32.totalorder %v150, %v37
    %vm188 = vcmp.eq.s32.totalorder %v153, %v36
    %vm189 = vcmp.eq.s32.totalorder %v153, %v37
    %vm190 = vcmp.eq.s32.totalorder %v156, %v36
    %vm191 = vcmp.eq.s32.totalorder %v156, %v37
    %vm192 = vcmp.eq.s32.totalorder %v159, %v36
    %vm193 = vcmp.eq.s32.totalorder %v159, %v37
    %vm194 = vcmp.eq.s32.totalorder %v162, %v36
    %vm195 = vcmp.eq.s32.totalorder %v162, %v37
    %vm196 = vcmp.eq.s32.totalorder %v165, %v36
    %vm197 = vcmp.eq.s32.totalorder %v165, %v37
    %vm198 = vmor %vm86, %vm166
    %vm199 = vmor %vm87, %vm167
    %vm200 = vmor %vm88, %vm168
    %vm201 = vmor %vm89, %vm169
    %vm202 = vmor %vm90, %vm170
    %vm203 = vmor %vm91, %vm171
    %vm204 = vmor %vm92, %vm172
    %vm205 = vmor %vm93, %vm173
    %vm206 = vmor %vm94, %vm174
    %vm207 = vmor %vm95, %vm175
    %vm208 = vmor %vm96, %vm176
    %vm209 = vmor %vm97, %vm177
    %vm210 = vmor %vm98, %vm178
    %vm211 = vmor %vm99, %vm179
    %vm212 = vmor %vm100, %vm180
    %vm213 = vmor %vm101, %vm181
    %vm214 = vmor %vm102, %vm182
    %vm215 = vmor %vm103, %vm183
    %vm216 = vmor %vm104, %vm184
    %vm217 = vmor %vm105, %vm185
    %vm218 = vmor %vm106, %vm186
    %vm219 = vmor %vm107, %vm187
    %vm220 = vmor %vm108, %vm188
    %vm221 = vmor %vm109, %vm189
    %vm222 = vmor %vm110, %vm190
    %vm223 = vmor %vm111, %vm191
    %vm224 = vmor %vm112, %vm192
    %vm225 = vmor %vm113, %vm193
    %vm226 = vmor %vm114, %vm194
    %vm227 = vmor %vm115, %vm195
    %vm228 = vmor %vm116, %vm196
    %vm229 = vmor %vm117, %vm197
    %230 = vset.pattern.permute.xlu0 2
    %231 = vperm.xlu0 %230, %v19
    %v232 = vpop.permute.xlu0 %231
    %233 = vset.pattern.permute.xlu0 2
    %234 = vperm.xlu0 %233, %v20
    %v235 = vpop.permute.xlu0 %234
    %236 = vset.pattern.permute.xlu0 2
    %237 = vperm.xlu0 %236, %v21
    %v238 = vpop.permute.xlu0 %237
    %239 = vset.pattern.permute.xlu0 2
    %240 = vperm.xlu0 %239, %v22
    %v241 = vpop.permute.xlu0 %240
    %242 = vset.pattern.permute.xlu0 2
    %243 = vperm.xlu0 %242, %v23
    %v244 = vpop.permute.xlu0 %243
    %245 = vset.pattern.permute.xlu0 2
    %246 = vperm.xlu0 %245, %v24
    %v247 = vpop.permute.xlu0 %246
    %248 = vset.pattern.permute.xlu0 2
    %249 = vperm.xlu0 %248, %v25
    %v250 = vpop.permute.xlu0 %249
    %251 = vset.pattern.permute.xlu0 2
    %252 = vperm.xlu0 %251, %v26
    %v253 = vpop.permute.xlu0 %252
    %254 = vset.pattern.permute.xlu0 2
    %255 = vperm.xlu0 %254, %v27
    %v256 = vpop.permute.xlu0 %255
    %257 = vset.pattern.permute.xlu0 2
    %258 = vperm.xlu0 %257, %v28
    %v259 = vpop.permute.xlu0 %258
    %260 = vset.pattern.permute.xlu0 2
    %261 = vperm.xlu0 %260, %v29
    %v262 = vpop.permute.xlu0 %261
    %263 = vset.pattern.permute.xlu0 2
    %264 = vperm.xlu0 %263, %v30
    %v265 = vpop.permute.xlu0 %264
    %266 = vset.pattern.permute.xlu0 2
    %267 = vperm.xlu0 %266, %v31
    %v268 = vpop.permute.xlu0 %267
    %269 = vset.pattern.permute.xlu0 2
    %270 = vperm.xlu0 %269, %v32
    %v271 = vpop.permute.xlu0 %270
    %272 = vset.pattern.permute.xlu0 2
    %273 = vperm.xlu0 %272, %v33
    %v274 = vpop.permute.xlu0 %273
    %275 = vset.pattern.permute.xlu0 2
    %276 = vperm.xlu0 %275, %v34
    %v277 = vpop.permute.xlu0 %276
    %vm278 = vcmp.eq.s32.totalorder %v232, %v36
    %vm279 = vcmp.eq.s32.totalorder %v232, %v37
    %vm280 = vcmp.eq.s32.totalorder %v235, %v36
    %vm281 = vcmp.eq.s32.totalorder %v235, %v37
    %vm282 = vcmp.eq.s32.totalorder %v238, %v36
    %vm283 = vcmp.eq.s32.totalorder %v238, %v37
    %vm284 = vcmp.eq.s32.totalorder %v241, %v36
    %vm285 = vcmp.eq.s32.totalorder %v241, %v37
    %vm286 = vcmp.eq.s32.totalorder %v244, %v36
    %vm287 = vcmp.eq.s32.totalorder %v244, %v37
    %vm288 = vcmp.eq.s32.totalorder %v247, %v36
    %vm289 = vcmp.eq.s32.totalorder %v247, %v37
    %vm290 = vcmp.eq.s32.totalorder %v250, %v36
    %vm291 = vcmp.eq.s32.totalorder %v250, %v37
    %vm292 = vcmp.eq.s32.totalorder %v253, %v36
    %vm293 = vcmp.eq.s32.totalorder %v253, %v37
    %vm294 = vcmp.eq.s32.totalorder %v256, %v36
    %vm295 = vcmp.eq.s32.totalorder %v256, %v37
    %vm296 = vcmp.eq.s32.totalorder %v259, %v36
    %vm297 = vcmp.eq.s32.totalorder %v259, %v37
    %vm298 = vcmp.eq.s32.totalorder %v262, %v36
    %vm299 = vcmp.eq.s32.totalorder %v262, %v37
    %vm300 = vcmp.eq.s32.totalorder %v265, %v36
    %vm301 = vcmp.eq.s32.totalorder %v265, %v37
    %vm302 = vcmp.eq.s32.totalorder %v268, %v36
    %vm303 = vcmp.eq.s32.totalorder %v268, %v37
    %vm304 = vcmp.eq.s32.totalorder %v271, %v36
    %vm305 = vcmp.eq.s32.totalorder %v271, %v37
    %vm306 = vcmp.eq.s32.totalorder %v274, %v36
    %vm307 = vcmp.eq.s32.totalorder %v274, %v37
    %vm308 = vcmp.eq.s32.totalorder %v277, %v36
    %vm309 = vcmp.eq.s32.totalorder %v277, %v37
    %vm310 = vmor %vm198, %vm278
    %vm311 = vmor %vm199, %vm279
    %vm312 = vmor %vm200, %vm280
    %vm313 = vmor %vm201, %vm281
    %vm314 = vmor %vm202, %vm282
    %vm315 = vmor %vm203, %vm283
    %vm316 = vmor %vm204, %vm284
    %vm317 = vmor %vm205, %vm285
    %vm318 = vmor %vm206, %vm286
    %vm319 = vmor %vm207, %vm287
    %vm320 = vmor %vm208, %vm288
    %vm321 = vmor %vm209, %vm289
    %vm322 = vmor %vm210, %vm290
    %vm323 = vmor %vm211, %vm291
    %vm324 = vmor %vm212, %vm292
    %vm325 = vmor %vm213, %vm293
    %vm326 = vmor %vm214, %vm294
    %vm327 = vmor %vm215, %vm295
    %vm328 = vmor %vm216, %vm296
    %vm329 = vmor %vm217, %vm297
    %vm330 = vmor %vm218, %vm298
    %vm331 = vmor %vm219, %vm299
    %vm332 = vmor %vm220, %vm300
    %vm333 = vmor %vm221, %vm301
    %vm334 = vmor %vm222, %vm302
    %vm335 = vmor %vm223, %vm303
    %vm336 = vmor %vm224, %vm304
    %vm337 = vmor %vm225, %vm305
    %vm338 = vmor %vm226, %vm306
    %vm339 = vmor %vm227, %vm307
    %vm340 = vmor %vm228, %vm308
    %vm341 = vmor %vm229, %vm309
    %v342 = vsel %vm310, 1, 0
    %v343 = vsel %vm311, 1, 0
    %v344 = vsel %vm312, 1, 0
    %v345 = vsel %vm313, 1, 0
    %v346 = vsel %vm314, 1, 0
    %v347 = vsel %vm315, 1, 0
    %v348 = vsel %vm316, 1, 0
    %v349 = vsel %vm317, 1, 0
    %v350 = vsel %vm318, 1, 0
    %v351 = vsel %vm319, 1, 0
    %v352 = vsel %vm320, 1, 0
    %v353 = vsel %vm321, 1, 0
    %v354 = vsel %vm322, 1, 0
    %v355 = vsel %vm323, 1, 0
    %v356 = vsel %vm324, 1, 0
    %v357 = vsel %vm325, 1, 0
    %v358 = vsel %vm326, 1, 0
    %v359 = vsel %vm327, 1, 0
    %v360 = vsel %vm328, 1, 0
    %v361 = vsel %vm329, 1, 0
    %v362 = vsel %vm330, 1, 0
    %v363 = vsel %vm331, 1, 0
    %v364 = vsel %vm332, 1, 0
    %v365 = vsel %vm333, 1, 0
    %v366 = vsel %vm334, 1, 0
    %v367 = vsel %vm335, 1, 0
    %v368 = vsel %vm336, 1, 0
    %v369 = vsel %vm337, 1, 0
    %v370 = vsel %vm338, 1, 0
    %v371 = vsel %vm339, 1, 0
    %v372 = vsel %vm340, 1, 0
    %v373 = vsel %vm341, 1, 0
    %v374 = vcvt.s32.f32 %v342
    %v375 = vcvt.s32.f32 %v343
    %v376 = vcvt.s32.f32 %v344
    %v377 = vcvt.s32.f32 %v345
    %v378 = vcvt.s32.f32 %v346
    %v379 = vcvt.s32.f32 %v347
    %v380 = vcvt.s32.f32 %v348
    %v381 = vcvt.s32.f32 %v349
    %v382 = vcvt.s32.f32 %v350
    %v383 = vcvt.s32.f32 %v351
    %v384 = vcvt.s32.f32 %v352
    %v385 = vcvt.s32.f32 %v353
    %v386 = vcvt.s32.f32 %v354
    %v387 = vcvt.s32.f32 %v355
    %v388 = vcvt.s32.f32 %v356
    %v389 = vcvt.s32.f32 %v357
    %v390 = vcvt.s32.f32 %v358
    %v391 = vcvt.s32.f32 %v359
    %v392 = vcvt.s32.f32 %v360
    %v393 = vcvt.s32.f32 %v361
    %v394 = vcvt.s32.f32 %v362
    %v395 = vcvt.s32.f32 %v363
    %v396 = vcvt.s32.f32 %v364
    %v397 = vcvt.s32.f32 %v365
    %v398 = vcvt.s32.f32 %v366
    %v399 = vcvt.s32.f32 %v367
    %v400 = vcvt.s32.f32 %v368
    %v401 = vcvt.s32.f32 %v369
    %v402 = vcvt.s32.f32 %v370
    %v403 = vcvt.s32.f32 %v371
    %v404 = vcvt.s32.f32 %v372
    %v405 = vcvt.s32.f32 %v373
    %v406 = vpack.c.bf16 %v376, %v374
    %v407 = vpack.c.bf16 %v377, %v375
    %v408 = vpack.c.bf16 %v380, %v378
    %v409 = vpack.c.bf16 %v381, %v379
    %v410 = vpack.c.bf16 %v384, %v382
    %v411 = vpack.c.bf16 %v385, %v383
    %v412 = vpack.c.bf16 %v388, %v386
    %v413 = vpack.c.bf16 %v389, %v387
    %v414 = vpack.c.bf16 %v392, %v390
    %v415 = vpack.c.bf16 %v393, %v391
    %v416 = vpack.c.bf16 %v396, %v394
    %v417 = vpack.c.bf16 %v397, %v395
    %v418 = vpack.c.bf16 %v400, %v398
    %v419 = vpack.c.bf16 %v401, %v399
    %v420 = vpack.c.bf16 %v404, %v402
    %v421 = vpack.c.bf16 %v405, %v403
    %v422 = vld [vmem:[%s1] sm:$0xf]
    %v423 = vld [vmem:[%s1 + $0x4] sm:$0xf]
    %v424 = vld [vmem:[%s1 + $0x8] sm:$0xf]
    %v425 = vld [vmem:[%s1 + $0xc] sm:$0xf]
    %v426 = vld [vmem:[%s1 + $0x10] sm:$0xf]
    %v427 = vld [vmem:[%s1 + $0x14] sm:$0xf]
    %v428 = vld [vmem:[%s1 + $0x18] sm:$0xf]
    %v429 = vld [vmem:[%s1 + $0x1c] sm:$0xf]
    %v430 = vld [vmem:[%s1 + $0x20] sm:$0xf]
    %v431 = vld [vmem:[%s1 + $0x24] sm:$0xf]
    %v432 = vld [vmem:[%s1 + $0x28] sm:$0xf]
    %v433 = vld [vmem:[%s1 + $0x2c] sm:$0xf]
    %v434 = vld [vmem:[%s1 + $0x30] sm:$0xf]
    %v435 = vld [vmem:[%s1 + $0x34] sm:$0xf]
    %v436 = vld [vmem:[%s1 + $0x38] sm:$0xf]
    %v437 = vld [vmem:[%s1 + $0x3c] sm:$0xf]
    %v438 = vld [vmem:[%s1 + $0x40] sm:$0xf]
    %v439 = vld [vmem:[%s1 + $0x44] sm:$0xf]
    %v440 = vld [vmem:[%s1 + $0x48] sm:$0xf]
    %v441 = vld [vmem:[%s1 + $0x4c] sm:$0xf]
    %v442 = vld [vmem:[%s1 + $0x50] sm:$0xf]
    %v443 = vld [vmem:[%s1 + $0x54] sm:$0xf]
    %v444 = vld [vmem:[%s1 + $0x58] sm:$0xf]
    %v445 = vld [vmem:[%s1 + $0x5c] sm:$0xf]
    %v446 = vld [vmem:[%s1 + $0x60] sm:$0xf]
    %v447 = vld [vmem:[%s1 + $0x64] sm:$0xf]
    %v448 = vld [vmem:[%s1 + $0x68] sm:$0xf]
    %v449 = vld [vmem:[%s1 + $0x6c] sm:$0xf]
    %v450 = vld [vmem:[%s1 + $0x70] sm:$0xf]
    %v451 = vld [vmem:[%s1 + $0x74] sm:$0xf]
    %v452 = vld [vmem:[%s1 + $0x78] sm:$0xf]
    %v453 = vld [vmem:[%s1 + $0x7c] sm:$0xf]
    %v454 = vld [vmem:[%s2] sm:$0xf]
    %v455 = vld [vmem:[%s2 + $0x4] sm:$0xf]
    %v456 = vld [vmem:[%s2 + $0x8] sm:$0xf]
    %v457 = vld [vmem:[%s2 + $0xc] sm:$0xf]
    %v458 = vld [vmem:[%s2 + $0x10] sm:$0xf]
    %v459 = vld [vmem:[%s2 + $0x14] sm:$0xf]
    %v460 = vld [vmem:[%s2 + $0x18] sm:$0xf]
    %v461 = vld [vmem:[%s2 + $0x1c] sm:$0xf]
    %v462 = vld [vmem:[%s2 + $0x20] sm:$0xf]
    %v463 = vld [vmem:[%s2 + $0x24] sm:$0xf]
    %v464 = vld [vmem:[%s2 + $0x28] sm:$0xf]
    %v465 = vld [vmem:[%s2 + $0x2c] sm:$0xf]
    %v466 = vld [vmem:[%s2 + $0x30] sm:$0xf]
    %v467 = vld [vmem:[%s2 + $0x34] sm:$0xf]
    %v468 = vld [vmem:[%s2 + $0x38] sm:$0xf]
    %v469 = vld [vmem:[%s2 + $0x3c] sm:$0xf]
    %v470 = vld [vmem:[%s2 + $0x40] sm:$0xf]
    %v471 = vld [vmem:[%s2 + $0x44] sm:$0xf]
    %v472 = vld [vmem:[%s2 + $0x48] sm:$0xf]
    %v473 = vld [vmem:[%s2 + $0x4c] sm:$0xf]
    %v474 = vld [vmem:[%s2 + $0x50] sm:$0xf]
    %v475 = vld [vmem:[%s2 + $0x54] sm:$0xf]
    %v476 = vld [vmem:[%s2 + $0x58] sm:$0xf]
    %v477 = vld [vmem:[%s2 + $0x5c] sm:$0xf]
    %v478 = vld [vmem:[%s2 + $0x60] sm:$0xf]
    %v479 = vld [vmem:[%s2 + $0x64] sm:$0xf]
    %v480 = vld [vmem:[%s2 + $0x68] sm:$0xf]
    %v481 = vld [vmem:[%s2 + $0x6c] sm:$0xf]
    %v482 = vld [vmem:[%s2 + $0x70] sm:$0xf]
    %v483 = vld [vmem:[%s2 + $0x74] sm:$0xf]
    %v484 = vld [vmem:[%s2 + $0x78] sm:$0xf]
    %v485 = vld [vmem:[%s2 + $0x7c] sm:$0xf]
    %v518 = vunpack.c.l.b16 %v454
    %v519 = vunpack.c.l.b16 %v455
    %v520 = vunpack.c.l.b16 %v456
    %v521 = vunpack.c.l.b16 %v457
    %v522 = vunpack.c.l.b16 %v458
    %v523 = vunpack.c.l.b16 %v459
    %v524 = vunpack.c.l.b16 %v460
    %v525 = vunpack.c.l.b16 %v461
    %v526 = vunpack.c.l.b16 %v462
    %v527 = vunpack.c.l.b16 %v463
    %v528 = vunpack.c.l.b16 %v464
    %v529 = vunpack.c.l.b16 %v465
    %v530 = vunpack.c.l.b16 %v466
    %v531 = vunpack.c.l.b16 %v467
    %v532 = vunpack.c.l.b16 %v468
    %v533 = vunpack.c.l.b16 %v469
    %v534 = vunpack.c.l.b16 %v470
    %v535 = vunpack.c.l.b16 %v471
    %v536 = vunpack.c.l.b16 %v472
    %v537 = vunpack.c.l.b16 %v473
    %v538 = vunpack.c.l.b16 %v474
    %v539 = vunpack.c.l.b16 %v475
    %v540 = vunpack.c.l.b16 %v476
    %v541 = vunpack.c.l.b16 %v477
    %v542 = vunpack.c.l.b16 %v478
    %v543 = vunpack.c.l.b16 %v479
    %v544 = vunpack.c.l.b16 %v480
    %v545 = vunpack.c.l.b16 %v481
    %v546 = vunpack.c.l.b16 %v482
    %v547 = vunpack.c.l.b16 %v483
    %v548 = vunpack.c.l.b16 %v484
    %v549 = vunpack.c.l.b16 %v485
    %v550 = vpack.c.b16 %v519, %v518
    %v551 = vpack.c.b16 %v521, %v520
    %v552 = vpack.c.b16 %v523, %v522
    %v553 = vpack.c.b16 %v525, %v524
    %v554 = vpack.c.b16 %v527, %v526
    %v555 = vpack.c.b16 %v529, %v528
    %v556 = vpack.c.b16 %v531, %v530
    %v557 = vpack.c.b16 %v533, %v532
    %v558 = vpack.c.b16 %v535, %v534
    %v559 = vpack.c.b16 %v537, %v536
    %v560 = vpack.c.b16 %v539, %v538
    %v561 = vpack.c.b16 %v541, %v540
    %v562 = vpack.c.b16 %v543, %v542
    %v563 = vpack.c.b16 %v545, %v544
    %v564 = vpack.c.b16 %v547, %v546
    %v565 = vpack.c.b16 %v549, %v548
    %582 = vmatprep.subr.bf16.mxu0 0
    %583 = vmatpush1.bf16.msra.mxu0 %v557
    %584 = vmatprep.subr.bf16.mxu0 0
    %585 = vmatpush1.bf16.msra.mxu0 %v556
    %586 = vmatprep.subr.bf16.mxu0 0
    %587 = vmatpush1.bf16.msra.mxu0 %v555
    %588 = vmatprep.subr.bf16.mxu0 0
    %589 = vmatpush1.bf16.msra.mxu0 %v554
    %590 = vmatprep.subr.bf16.mxu0 0
    %591 = vmatpush1.bf16.msra.mxu0 %v553
    %592 = vmatprep.subr.bf16.mxu0 0
    %593 = vmatpush1.bf16.msra.mxu0 %v552
    %594 = vmatprep.subr.bf16.mxu0 0
    %595 = vmatpush1.bf16.msra.mxu0 %v551
    %596 = vmatprep.subr.bf16.mxu0 0
    %597 = vmatpush1.bf16.msra.mxu0 %v550
    %598 = vmatprep.subr.bf16.mxu0 0
    %599 = vmatpush2.bf16.msra.mxu0 %v565
    %600 = vmatprep.subr.bf16.mxu0 0
    %601 = vmatpush2.bf16.msra.mxu0 %v564
    %602 = vmatprep.subr.bf16.mxu0 0
    %603 = vmatpush2.bf16.msra.mxu0 %v563
    %604 = vmatprep.subr.bf16.mxu0 0
    %605 = vmatpush2.bf16.msra.mxu0 %v562
    %606 = vmatprep.subr.bf16.mxu0 0
    %607 = vmatpush2.bf16.msra.mxu0 %v561
    %608 = vmatprep.subr.bf16.mxu0 0
    %609 = vmatpush2.bf16.msra.mxu0 %v560
    %610 = vmatprep.subr.bf16.mxu0 0
    %611 = vmatpush2.bf16.msra.mxu0 %v559
    %612 = vmatprep.subr.bf16.mxu0 0
    %613 = vmatpush2.bf16.msra.mxu0 %v558
    %614 = vmatprep.mubr.bf16.mxu0 %v407
    %615 = vmatmul.mubr.bf16.gmra.mxu0 %v406
    %v616 = vpop.f32.mrf.mxu0
    %v617 = vadd.f32 0.0, %v616
    %v618 = vpop.f32.mrf.mxu0
    %v619 = vpop.f32.mrf.mxu0
    %v620 = vadd.f32 0.0, %v619
    %v621 = vpop.f32.mrf.mxu0
    %622 = vmatprep.mubr.bf16.mxu0 %v409
    %623 = vmatmul.mubr.bf16.gmra.mxu0 %v408
    %v624 = vpop.f32.mrf.mxu0
    %v625 = vadd.f32 0.0, %v624
    %v626 = vpop.f32.mrf.mxu0
    %v627 = vpop.f32.mrf.mxu0
    %v628 = vadd.f32 0.0, %v627
    %v629 = vpop.f32.mrf.mxu0
    %630 = vmatprep.mubr.bf16.mxu0 %v411
    %631 = vmatmul.mubr.bf16.gmra.mxu0 %v410
    %v632 = vpop.f32.mrf.mxu0
    %v633 = vadd.f32 0.0, %v632
    %v634 = vpop.f32.mrf.mxu0
    %v635 = vpop.f32.mrf.mxu0
    %v636 = vadd.f32 0.0, %v635
    %v637 = vpop.f32.mrf.mxu0
    %638 = vmatprep.mubr.bf16.mxu0 %v413
    %639 = vmatmul.mubr.bf16.gmra.mxu0 %v412
    %v640 = vpop.f32.mrf.mxu0
    %v641 = vadd.f32 0.0, %v640
    %v642 = vpop.f32.mrf.mxu0
    %v643 = vpop.f32.mrf.mxu0
    %v644 = vadd.f32 0.0, %v643
    %v645 = vpop.f32.mrf.mxu0
    %646 = vmatprep.mubr.bf16.mxu0 %v415
    %647 = vmatmul.mubr.bf16.gmra.mxu0 %v414
    %v648 = vpop.f32.mrf.mxu0
    %v649 = vadd.f32 0.0, %v648
    %v650 = vpop.f32.mrf.mxu0
    %v651 = vpop.f32.mrf.mxu0
    %v652 = vadd.f32 0.0, %v651
    %v653 = vpop.f32.mrf.mxu0
    %654 = vmatprep.mubr.bf16.mxu0 %v417
    %655 = vmatmul.mubr.bf16.gmra.mxu0 %v416
    %v656 = vpop.f32.mrf.mxu0
    %v657 = vadd.f32 0.0, %v656
    %v658 = vpop.f32.mrf.mxu0
    %v659 = vpop.f32.mrf.mxu0
    %v660 = vadd.f32 0.0, %v659
    %v661 = vpop.f32.mrf.mxu0
    %662 = vmatprep.mubr.bf16.mxu0 %v419
    %663 = vmatmul.mubr.bf16.gmra.mxu0 %v418
    %v664 = vpop.f32.mrf.mxu0
    %v665 = vadd.f32 0.0, %v664
    %v666 = vpop.f32.mrf.mxu0
    %v667 = vpop.f32.mrf.mxu0
    %v668 = vadd.f32 0.0, %v667
    %v669 = vpop.f32.mrf.mxu0
    %670 = vmatprep.mubr.bf16.mxu0 %v421
    %671 = vmatmul.mubr.bf16.gmra.mxu0 %v420
    %v672 = vpop.f32.mrf.mxu0
    %v673 = vadd.f32 0.0, %v672
    %v674 = vpop.f32.mrf.mxu0
    %v675 = vpop.f32.mrf.mxu0
    %v676 = vadd.f32 0.0, %v675
    %v677 = vpop.f32.mrf.mxu0
    %678 = vdwg.mxu0
    %v711 = vunpack.c.l.b16 %v422
    %v712 = vunpack.c.l.b16 %v423
    %v713 = vunpack.c.l.b16 %v424
    %v714 = vunpack.c.l.b16 %v425
    %v715 = vunpack.c.l.b16 %v426
    %v716 = vunpack.c.l.b16 %v427
    %v717 = vunpack.c.l.b16 %v428
    %v718 = vunpack.c.l.b16 %v429
    %v719 = vunpack.c.l.b16 %v430
    %v720 = vunpack.c.l.b16 %v431
    %v721 = vunpack.c.l.b16 %v432
    %v722 = vunpack.c.l.b16 %v433
    %v723 = vunpack.c.l.b16 %v434
    %v724 = vunpack.c.l.b16 %v435
    %v725 = vunpack.c.l.b16 %v436
    %v726 = vunpack.c.l.b16 %v437
    %v727 = vunpack.c.l.b16 %v438
    %v728 = vunpack.c.l.b16 %v439
    %v729 = vunpack.c.l.b16 %v440
    %v730 = vunpack.c.l.b16 %v441
    %v731 = vunpack.c.l.b16 %v442
    %v732 = vunpack.c.l.b16 %v443
    %v733 = vunpack.c.l.b16 %v444
    %v734 = vunpack.c.l.b16 %v445
    %v735 = vunpack.c.l.b16 %v446
    %v736 = vunpack.c.l.b16 %v447
    %v737 = vunpack.c.l.b16 %v448
    %v738 = vunpack.c.l.b16 %v449
    %v739 = vunpack.c.l.b16 %v450
    %v740 = vunpack.c.l.b16 %v451
    %v741 = vunpack.c.l.b16 %v452
    %v742 = vunpack.c.l.b16 %v453
    %v743 = vpack.c.b16 %v712, %v711
    %v744 = vpack.c.b16 %v714, %v713
    %v745 = vpack.c.b16 %v716, %v715
    %v746 = vpack.c.b16 %v718, %v717
    %v747 = vpack.c.b16 %v720, %v719
    %v748 = vpack.c.b16 %v722, %v721
    %v749 = vpack.c.b16 %v724, %v723
    %v750 = vpack.c.b16 %v726, %v725
    %v751 = vpack.c.b16 %v728, %v727
    %v752 = vpack.c.b16 %v730, %v729
    %v753 = vpack.c.b16 %v732, %v731
    %v754 = vpack.c.b16 %v734, %v733
    %v755 = vpack.c.b16 %v736, %v735
    %v756 = vpack.c.b16 %v738, %v737
    %v757 = vpack.c.b16 %v740, %v739
    %v758 = vpack.c.b16 %v742, %v741
    %775 = vmatprep.subr.bf16.mxu0 0
    %776 = vmatpush1.bf16.msra.mxu0 %v750
    %777 = vmatprep.subr.bf16.mxu0 0
    %778 = vmatpush1.bf16.msra.mxu0 %v749
    %779 = vmatprep.subr.bf16.mxu0 0
    %780 = vmatpush1.bf16.msra.mxu0 %v748
    %781 = vmatprep.subr.bf16.mxu0 0
    %782 = vmatpush1.bf16.msra.mxu0 %v747
    %783 = vmatprep.subr.bf16.mxu0 0
    %784 = vmatpush1.bf16.msra.mxu0 %v746
    %785 = vmatprep.subr.bf16.mxu0 0
    %786 = vmatpush1.bf16.msra.mxu0 %v745
    %787 = vmatprep.subr.bf16.mxu0 0
    %788 = vmatpush1.bf16.msra.mxu0 %v744
    %789 = vmatprep.subr.bf16.mxu0 0
    %790 = vmatpush1.bf16.msra.mxu0 %v743
    %791 = vmatprep.subr.bf16.mxu0 0
    %792 = vmatpush2.bf16.msra.mxu0 %v758
    %793 = vmatprep.subr.bf16.mxu0 0
    %794 = vmatpush2.bf16.msra.mxu0 %v757
    %795 = vmatprep.subr.bf16.mxu0 0
    %796 = vmatpush2.bf16.msra.mxu0 %v756
    %797 = vmatprep.subr.bf16.mxu0 0
    %798 = vmatpush2.bf16.msra.mxu0 %v755
    %799 = vmatprep.subr.bf16.mxu0 0
    %800 = vmatpush2.bf16.msra.mxu0 %v754
    %801 = vmatprep.subr.bf16.mxu0 0
    %802 = vmatpush2.bf16.msra.mxu0 %v753
    %803 = vmatprep.subr.bf16.mxu0 0
    %804 = vmatpush2.bf16.msra.mxu0 %v752
    %805 = vmatprep.subr.bf16.mxu0 0
    %806 = vmatpush2.bf16.msra.mxu0 %v751
    %807 = vmatprep.mubr.bf16.mxu0 %v407
    %808 = vmatmul.mubr.bf16.gmra.mxu0 %v406
    %v809 = vpop.f32.mrf.mxu0
    %v810 = vadd.f32 %v617, %v809
    %v811 = vpop.f32.mrf.mxu0
    %v812 = vpop.f32.mrf.mxu0
    %v813 = vadd.f32 %v620, %v812
    %v814 = vpop.f32.mrf.mxu0
    %815 = vmatprep.mubr.bf16.mxu0 %v409
    %816 = vmatmul.mubr.bf16.gmra.mxu0 %v408
    %v817 = vpop.f32.mrf.mxu0
    %v818 = vadd.f32 %v625, %v817
    %v819 = vpop.f32.mrf.mxu0
    %v820 = vpop.f32.mrf.mxu0
    %v821 = vadd.f32 %v628, %v820
    %v822 = vpop.f32.mrf.mxu0
    %823 = vmatprep.mubr.bf16.mxu0 %v411
    %824 = vmatmul.mubr.bf16.gmra.mxu0 %v410
    %v825 = vpop.f32.mrf.mxu0
    %v826 = vadd.f32 %v633, %v825
    %v827 = vpop.f32.mrf.mxu0
    %v828 = vpop.f32.mrf.mxu0
    %v829 = vadd.f32 %v636, %v828
    %v830 = vpop.f32.mrf.mxu0
    %831 = vmatprep.mubr.bf16.mxu0 %v413
    %832 = vmatmul.mubr.bf16.gmra.mxu0 %v412
    %v833 = vpop.f32.mrf.mxu0
    %v834 = vadd.f32 %v641, %v833
    %v835 = vpop.f32.mrf.mxu0
    %v836 = vpop.f32.mrf.mxu0
    %v837 = vadd.f32 %v644, %v836
    %v838 = vpop.f32.mrf.mxu0
    %839 = vmatprep.mubr.bf16.mxu0 %v415
    %840 = vmatmul.mubr.bf16.gmra.mxu0 %v414
    %v841 = vpop.f32.mrf.mxu0
    %v842 = vadd.f32 %v649, %v841
    %v843 = vpop.f32.mrf.mxu0
    %v844 = vpop.f32.mrf.mxu0
    %v845 = vadd.f32 %v652, %v844
    %v846 = vpop.f32.mrf.mxu0
    %847 = vmatprep.mubr.bf16.mxu0 %v417
    %848 = vmatmul.mubr.bf16.gmra.mxu0 %v416
    %v849 = vpop.f32.mrf.mxu0
    %v850 = vadd.f32 %v657, %v849
    %v851 = vpop.f32.mrf.mxu0
    %v852 = vpop.f32.mrf.mxu0
    %v853 = vadd.f32 %v660, %v852
    %v854 = vpop.f32.mrf.mxu0
    %855 = vmatprep.mubr.bf16.mxu0 %v419
    %856 = vmatmul.mubr.bf16.gmra.mxu0 %v418
    %v857 = vpop.f32.mrf.mxu0
    %v858 = vadd.f32 %v665, %v857
    %v859 = vpop.f32.mrf.mxu0
    %v860 = vpop.f32.mrf.mxu0
    %v861 = vadd.f32 %v668, %v860
    %v862 = vpop.f32.mrf.mxu0
    %863 = vmatprep.mubr.bf16.mxu0 %v421
    %864 = vmatmul.mubr.bf16.gmra.mxu0 %v420
    %v865 = vpop.f32.mrf.mxu0
    %v866 = vadd.f32 %v673, %v865
    %v867 = vpop.f32.mrf.mxu0
    %v868 = vpop.f32.mrf.mxu0
    %v869 = vadd.f32 %v676, %v868
    %v870 = vpop.f32.mrf.mxu0
    %871 = vdwg.mxu0
    %v872 = vmax.f32 %v810, %v813
    %v873 = vrot.slane %v872, 4
    %v874 = vmax.f32 %v872, %v873
    %v875 = vrot.slane %v874, 2
    %v876 = vmax.f32 %v874, %v875
    %v877 = vrot.slane %v876, 1
    %v878 = vmax.f32 %v876, %v877
    %v879 = vmax.f32 %v818, %v821
    %v880 = vrot.slane %v879, 4
    %v881 = vmax.f32 %v879, %v880
    %v882 = vrot.slane %v881, 2
    %v883 = vmax.f32 %v881, %v882
    %v884 = vrot.slane %v883, 1
    %v885 = vmax.f32 %v883, %v884
    %v886 = vmax.f32 %v826, %v829
    %v887 = vrot.slane %v886, 4
    %v888 = vmax.f32 %v886, %v887
    %v889 = vrot.slane %v888, 2
    %v890 = vmax.f32 %v888, %v889
    %v891 = vrot.slane %v890, 1
    %v892 = vmax.f32 %v890, %v891
    %v893 = vmax.f32 %v834, %v837
    %v894 = vrot.slane %v893, 4
    %v895 = vmax.f32 %v893, %v894
    %v896 = vrot.slane %v895, 2
    %v897 = vmax.f32 %v895, %v896
    %v898 = vrot.slane %v897, 1
    %v899 = vmax.f32 %v897, %v898
    %v900 = vmax.f32 %v842, %v845
    %v901 = vrot.slane %v900, 4
    %v902 = vmax.f32 %v900, %v901
    %v903 = vrot.slane %v902, 2
    %v904 = vmax.f32 %v902, %v903
    %v905 = vrot.slane %v904, 1
    %v906 = vmax.f32 %v904, %v905
    %v907 = vmax.f32 %v850, %v853
    %v908 = vrot.slane %v907, 4
    %v909 = vmax.f32 %v907, %v908
    %v910 = vrot.slane %v909, 2
    %v911 = vmax.f32 %v909, %v910
    %v912 = vrot.slane %v911, 1
    %v913 = vmax.f32 %v911, %v912
    %v914 = vmax.f32 %v858, %v861
    %v915 = vrot.slane %v914, 4
    %v916 = vmax.f32 %v914, %v915
    %v917 = vrot.slane %v916, 2
    %v918 = vmax.f32 %v916, %v917
    %v919 = vrot.slane %v918, 1
    %v920 = vmax.f32 %v918, %v919
    %v921 = vmax.f32 %v866, %v869
    %v922 = vrot.slane %v921, 4
    %v923 = vmax.f32 %v921, %v922
    %v924 = vrot.slane %v923, 2
    %v925 = vmax.f32 %v923, %v924
    %v926 = vrot.slane %v925, 1
    %v927 = vmax.f32 %v925, %v926
    %v928 = vld [vmem:[%s3] sm:$0x1]
    %v930 = vlaneseq
    %v931 = vshrl.u32 %v930, 7
    %v932 = vsub.s32 0, %v931
    %v933 = vrot.slane %v928, %v932
    %v935 = vadd.f32 %v878, %v933
    %v936 = vadd.f32 %v885, %v933
    %v937 = vadd.f32 %v892, %v933
    %v938 = vadd.f32 %v899, %v933
    %v939 = vadd.f32 %v906, %v933
    %v940 = vadd.f32 %v913, %v933
    %v941 = vadd.f32 %v920, %v933
    %v942 = vadd.f32 %v927, %v933
    %v951 = vrot.slane %v936, 7
    %vm952 = vcmask 1041409
    %v953 = vsel %vm952, %v951, %v935
    %v954 = vrot.slane %v937, 6
    %vm955 = vcmask 1042434
    %v956 = vsel %vm955, %v954, %v953
    %v957 = vrot.slane %v938, 5
    %vm958 = vcmask 1043459
    %v959 = vsel %vm958, %v957, %v956
    %v960 = vrot.slane %v939, 4
    %vm961 = vcmask 1044484
    %v962 = vsel %vm961, %v960, %v959
    %v963 = vrot.slane %v940, 3
    %vm964 = vcmask 1045509
    %v965 = vsel %vm964, %v963, %v962
    %v966 = vrot.slane %v941, 2
    %vm967 = vcmask 1046534
    %v968 = vsel %vm967, %v966, %v965
    %v969 = vrot.slane %v942, 1
    %vm970 = vcmask 1047559
    %v971 = vsel %vm970, %v969, %v968
    %973 = vst [vmem:[#allocation2] sm:$0xff] %v971
    // Predicated region
    $region18: #{word_cnn_forward.1} parent=1 // pred_check
      _
    $region19: #{word_cnn_forward.1} parent=1 // pred_check_branch
      %975 = sbr.rel (0) target = $region21
    $region20: #{word_cnn_forward.1} parent=1 // pred_region
      %s977 = ssub.s32 128, 128
      %978 = vsyncadd [#allocation3], %s977
      %s980 = sshll.u32 [#allocation2], 4
      %s981 = int_to_ptr.vmem [resolvable:$true] %s980
      %983 = dma.vmem_to_hbm [thread:$0]  %s981, 128, %s4, [#allocation3]
    $region21: #{word_cnn_forward.1} parent=1 // pred_fallthru
      _
    // Predicated region
    $region22: #{word_cnn_forward.1} parent=1 // pred_check
      _
    $region23: #{word_cnn_forward.1} parent=1 // pred_check_branch
      %985 = sbr.rel (0) target = $region25
    $region24: #{word_cnn_forward.1} parent=1 // pred_region
      %986 = dma.done [#allocation3], 128
    $region25: #{word_cnn_forward.1} parent=1 // pred_fallthru
      _
    %987 = vsyncpa [#allocation3], 1

</llo_original>
